<compile_context>
chip_gen: v7x
topology: tpu7x:2x2x1
jax: 0.10.0
libtpu: 0.0.40
codegen_flags: <defaults>
</compile_context>

<pallas_src>
import functools
import math

import jax
import jax.numpy as jnp
from jax.experimental import pallas as pl
from jax.experimental.pallas import tpu as pltpu

_LANE = 128
_SUBLANE = 8
_TARGET_TILE_BYTES = 2 * 1024 * 1024      # ~2 MiB per input buffer
_MAX_FALLBACK_LANE = 2048                 # cap on merged trailing-dim width


def _cdiv(a, b):
    return -(-a // b)


def _round_up(a, b):
    return _cdiv(a, b) * b


# ---------------------------------------------------------------------------
# Pallas kernel: applies the (closed-over) expression_fn on one VMEM tile.
# Supports N same-shape elementwise inputs (matches nn.Module.forward(*x)).
# ---------------------------------------------------------------------------
def _expression_kernel(*refs, expression_fn, n_inputs):
    in_refs = refs[:n_inputs]
    o_ref = refs[n_inputs]
    o_ref[...] = expression_fn(*(r[...] for r in in_refs)).astype(o_ref.dtype)


# ---------------------------------------------------------------------------
# Example expression functions used by DSANN (deterministic, no params).
# ---------------------------------------------------------------------------
def square(x):
    return x * x


def safe_log(x, eps=1e-6):
    return jnp.log(jnp.maximum(x, eps))


def compose(*fns):
    """Fuse a chain of elementwise expressions into one callable.

    Expression(compose(square, safe_log)) runs log(square(x)) in a single
    pallas_call, reading and writing HBM exactly once.  (Note: on v7x keep
    such chains to ~1 transcendental per element or they may become EUP-bound.)
    """
    def fused(*args):
        out = fns[0](*args)
        for fn in fns[1:]:
            out = fn(out)
        return out
    fused.__name__ = "_then_".join(getattr(f, "__name__", "fn") for f in fns)
    return fused


# ---------------------------------------------------------------------------
# Slab / tiling plan: free 2-D reshape (R, C), block (tr, C), 1-D grid.
# ---------------------------------------------------------------------------
def _plan_slab(shape, in_dtypes, out_dtype):
    total = math.prod(shape)
    itemsizes = ([jnp.dtype(d).itemsize for d in in_dtypes]
                 + [jnp.dtype(out_dtype).itemsize])
    # dtype-native sublane tile: 8 rows (32-bit), 16 (16-bit), 32 (8-bit).
    sub = _SUBLANE * max(1, 4 // min(itemsizes))
    max_item = max(itemsizes)

    R = C = None
    # Lane-dense slab (any multiple of 128 lanes keeps stores unmasked).
    for lane in (1024, 512, 256, 128):
        if total % lane == 0 and total // lane >= _SUBLANE:
            R, C = total // lane, lane
            break
    if R is None and total % _LANE == 0:
        R, C = total // _LANE, _LANE
    if R is None:
        # Unaligned element count: merge a trailing suffix of the original dims
        # (still a free reshape).  The block's minor dim equals the full array
        # dim, so no wrapper-side pad / slice is ever needed.
        C = 1
        for d in reversed(shape):
            if C > 1 and C * d > _MAX_FALLBACK_LANE:
                break
            C *= d
        C = max(C, 1)
        R = total // C

    lane_padded = _round_up(C, _LANE)
    tr = (_TARGET_TILE_BYTES // (lane_padded * max_item)) // sub * sub
    tr = max(sub, tr)
    if tr >= R:
        tr = R
        # v7x has 2 TensorCores; keep the "parallel" grid >= 2 when possible so
        # both cores (and both halves of the HBM feed) are used.
        if R >= 2 * sub:
            tr = _round_up(_cdiv(R, 2), sub)
    grid = _cdiv(R, tr)

    # Tight VMEM budget: 2-deep double buffering of every in/out tile + headroom.
    tile_rows = _round_up(tr, sub)
    tile_bytes = sum(tile_rows * lane_padded * it for it in itemsizes)
    vmem_limit = int(max(4 * 1024 * 1024, 2 * tile_bytes + 2 * 1024 * 1024))
    return R, C, tr, grid, vmem_limit


# ---------------------------------------------------------------------------
# Expression module (Pallas-backed)
# ---------------------------------------------------------------------------
class Expression:
    """Compute given expression on forward pass (Pallas TPU).

    Parameters
    ----------
    expression_fn : callable
        Applied to the forward inputs.
    elementwise : bool | None
        True  -> always use the tiled Pallas path (caller asserts the fn is
                 elementwise / shape-preserving).
        False -> always run the expression as plain JAX.
        None  -> auto-detect (shape-preserving => Pallas).  Shape-preserving but
                 NON-elementwise fns (softmax, per-tensor normalization, cumsum)
                 must pass elementwise=False.
    donate_input : bool
        If True and dtypes match, alias input 0 with the output buffer.
    """

    def __init__(self, expression_fn, elementwise=None, donate_input=False):
        self.expression_fn = expression_fn
        self.elementwise = elementwise
        self.donate_input = donate_input
        self._cache = {}

    # -- forward -----------------------------------------------------------
    def __call__(self, *xs):
        if len(xs) == 0:
            return self.expression_fn()
        xs = tuple(jnp.asarray(x) for x in xs)
        key = tuple((x.shape, str(x.dtype)) for x in xs)
        fn = self._cache.get(key)
        if fn is None:
            fn = self._build(xs)
            self._cache[key] = fn
        return fn(*xs)

    # -- per-signature builder (cached) -------------------------------------
    def _build(self, xs):
        shape = xs[0].shape
        total = math.prod(shape)
        try:
            out_aval = jax.eval_shape(lambda *a: self.expression_fn(*a), *xs)
        except Exception:
            out_aval = None

        same_shapes = all(x.shape == shape for x in xs)
        out_matches = getattr(out_aval, "shape", None) == shape

        use_pallas = self.elementwise
        if use_pallas is None:
            use_pallas = total > 0 and same_shapes and out_matches

        if (not use_pallas or out_aval is None or total == 0
                or not same_shapes or not out_matches):
            # TODO(synk): non-elementwise / shape-changing / broadcasting
            # expressions have no generic Pallas equivalent; run as plain JAX.
            return jax.jit(lambda *a: self.expression_fn(*a))

        out_dtype = out_aval.dtype
        in_dtypes = tuple(x.dtype for x in xs)
        R, C, tr, grid, vmem_limit = _plan_slab(shape, in_dtypes, out_dtype)

        kernel = functools.partial(_expression_kernel,
                                   expression_fn=self.expression_fn,
                                   n_inputs=len(xs))

        alias = {}
        if self.donate_input and jnp.dtype(in_dtypes[0]) == jnp.dtype(out_dtype):
            alias = {0: 0}

        pallas_fn = pl.pallas_call(
            kernel,
            out_shape=jax.ShapeDtypeStruct((R, C), out_dtype),
            grid_spec=pltpu.PrefetchScalarGridSpec(
                num_scalar_prefetch=0,
                grid=(grid,),
                in_specs=[pl.BlockSpec((tr, C), lambda i: (i, 0))
                          for _ in xs],
                out_specs=pl.BlockSpec((tr, C), lambda i: (i, 0)),
            ),
            compiler_params=pltpu.CompilerParams(
                dimension_semantics=("parallel",),
                vmem_limit_bytes=vmem_limit,
            ),
            input_output_aliases=alias,
        )

        def run(*args):
            # Reshapes below are free bitcasts (same element count, row-major);
            # no pad, no slice, no extra HBM passes.
            slabs = [a.reshape(R, C) for a in args]
            out2 = pallas_fn(*slabs)
            return out2.reshape(shape)

        return jax.jit(run)

    # -- repr (mirrors the PyTorch module) -----------------------------------
    def __repr__(self):
        if hasattr(self.expression_fn, "func") and hasattr(self.expression_fn,
                                                           "kwargs"):
            expression_str = "{:s} {:s}".format(
                self.expression_fn.func.__name__, str(self.expression_fn.kwargs))
        elif hasattr(self.expression_fn, "__name__"):
            expression_str = self.expression_fn.__name__
        else:
            expression_str = repr(self.expression_fn)
        return self.__class__.__name__ + "(expression=%s) " % expression_str


# ---------------------------------------------------------------------------
# Demo / correctness check
# ---------------------------------------------------------------------------
if __name__ == "__main__":
    key = jax.random.PRNGKey(0)
    # Small NCHW input consistent with a DSANN activation: [B, C, H, W]
    x = jax.random.normal(key, (2, 4, 16, 16), dtype=jnp.float32)

    square_mod = Expression(square)
    fused_mod = Expression(compose(square, safe_log))   # fused log(square(x))

    y_sq = square_mod(x)
    y_fused = fused_mod(x)
    jax.block_until_ready(y_sq)
    jax.block_until_ready(y_fused)

    ref_sq = x * x
    ref_fused = jnp.log(jnp.maximum(ref_sq, 1e-6))

    assert y_sq.shape == x.shape and y_sq.dtype == x.dtype
    assert jnp.allclose(y_sq, ref_sq, atol=1e-6, rtol=1e-6)
    assert jnp.allclose(y_fused, ref_fused, atol=1e-5, rtol=1e-5)

    # Cached path: second call reuses the jitted pallas executable.
    y_sq2 = square_mod(x)
    jax.block_until_ready(y_sq2)
    assert jnp.allclose(y_sq2, ref_sq, atol=1e-6, rtol=1e-6)

    # Exercise the unaligned path (element count not a multiple of 128):
    # handled by a free trailing-dim merge + ragged blocks, no pad / slice.
    x_odd = jax.random.normal(jax.random.PRNGKey(1), (3, 5, 7, 9),
                              dtype=jnp.float32)
    y_odd = fused_mod(x_odd)
    jax.block_until_ready(y_odd)
    ref_odd = jnp.log(jnp.maximum(x_odd * x_odd, 1e-6))
    assert y_odd.shape == x_odd.shape
    assert jnp.allclose(y_odd, ref_odd, atol=1e-5, rtol=1e-5)

    print("KERNEL_OK")
</pallas_src>

<mosaic_0001>
module attributes {stable_mosaic.version = 11 : i64} {
  func.func @_expression_kernel(%arg0: i32, %arg1: memref<8x256xf32, #tpu.memory_space<vmem>>, %arg2: memref<8x256xf32, #tpu.memory_space<vmem>>) attributes {dimension_semantics = [#tpu.dimension_semantics<parallel>], iteration_bounds = array<i64: 1>, scalar_prefetch = 0 : i64, scratch_operands = 0 : i64, tpu.core_type = #tpu.core_type<tc>, window_params = [{transform_indices = @transform_0, window_bounds = array<i64: 8, 256>}, {transform_indices = @transform_1, window_bounds = array<i64: 8, 256>}]} {
    %c0 = arith.constant 0 : index
    %c0_0 = arith.constant 0 : index
    %0 = vector.load %arg1[%c0, %c0_0] : memref<8x256xf32, #tpu.memory_space<vmem>>, vector<8x256xf32>
    %1 = arith.mulf %0, %0 : vector<8x256xf32>
    %c0_1 = arith.constant 0 : index
    %c0_2 = arith.constant 0 : index
    %2 = vector.load %arg2[%c0_1, %c0_2] : memref<8x256xf32, #tpu.memory_space<vmem>>, vector<8x256xf32>
    tpu.vector_store %arg2[%c0_1, %c0_2], %1 {strides = array<i32>} : memref<8x256xf32, #tpu.memory_space<vmem>>, vector<8x256xf32>,
    return
  }
  func.func @transform_0(%arg0: i32) -> (i32, i32) {
    %c0_i32 = arith.constant 0 : i32
    %c0_i32_0 = arith.constant 0 : i32
    return %arg0, %c0_i32 : i32, i32
  }
  func.func @transform_1(%arg0: i32) -> (i32, i32) {
    %c0_i32 = arith.constant 0 : i32
    %c0_i32_0 = arith.constant 0 : i32
    return %arg0, %c0_i32 : i32, i32
  }
}

</mosaic_0001>

<llo_original>
// kernel: run.1
$region0: #{run.1}
  #allocation0 [shape = 'u32[]', space=smem, size = 0x4, offset = 0x4, fixed_abs, tag = 'smem constant byte address 0x4 - core index']
  #allocation1 [shape = 'u32[144,128]{1,0:T(1,128)}', space=vmem, size = 0x12000, scoped, tag = 'internal scratch']
  %s0 = inlined_call_operand.vmem [shape: f32[8,256], index: 0, kind: input, shape index: {}]
  %s1 = inlined_call_operand.vmem [shape: f32[8,256], index: 1, kind: output, shape index: {}]
  %s2 = sld [smem:[#allocation0]]
  $region14: #{run.1} parent=0
    _
  %s4 = ssub.s32 1, %s2
  %s5 = scalar_select 0, %s4, %s2
  // Predicated region
  $region2: #{run.1} parent=0 // pred_check
    _
  $region3: #{run.1} parent=0 // pred_check_branch
    %7 = sbr.rel (0) target = $region5
  $region4: #{run.1} parent=0 // pred_region
    _
  $region5: #{run.1} parent=0 // pred_fallthru
    _
  %v8 = vld [vmem:[%s0] sm:$0xff]
  %v9 = vld [vmem:[%s0 + $0x8] sm:$0xff]
  %v10 = vmul.f32 %v8, %v8
  %v11 = vmul.f32 %v9, %v9
  %12 = vst [vmem:[%s1] sm:$0xff] %v10
  %13 = vst [vmem:[%s1 + $0x8] sm:$0xff] %v11
  // Predicated region
  $region6: #{run.1} parent=0 // pred_check
    _
  $region7: #{run.1} parent=0 // pred_check_branch
    %15 = sbr.rel (0) target = $region9
  $region8: #{run.1} parent=0 // pred_region
    _
  $region9: #{run.1} parent=0 // pred_fallthru
    _
  // Predicated region
  $region10: #{run.1} parent=0 // pred_check
    _
  $region11: #{run.1} parent=0 // pred_check_branch
    %17 = sbr.rel (0) target = $region13
  $region12: #{run.1} parent=0 // pred_region
    _
  $region13: #{run.1} parent=0 // pred_fallthru
    _

</llo_original>
